<compile_context>
chip_gen: v5e
topology: v5e:2x2
jax: 0.10.0
libtpu: 0.0.40
codegen_flags: <defaults>
</compile_context>

<pallas_src>
import math
import functools

import jax
import jax.numpy as jnp
from jax.experimental import pallas as pl
from jax.experimental.pallas import tpu as pltpu


# ---------------------------------------------------------------------------
# Fused Residual_group kernel: one grid step = one (batch, residual block).
# ---------------------------------------------------------------------------
def _residual_group_kernel(x_ref, pt_ref, wc_ref, bc_ref, wrs_ref, brs_ref,
                           skip_ref, h_sc, *, num_blocks, dilation_cycle):
    n = pl.program_id(1)                       # residual-block index (arbitrary axis)

    @pl.when(n == 0)
    def _init():
        h_sc[...] = x_ref[0]                   # carried activation for this batch
        skip_ref[...] = jnp.zeros_like(skip_ref)

    C, L = h_sc.shape

    # h += part_t  (the PyTorch `h += part_t` also mutates x through aliasing,
    # so the residual add below intentionally uses hh = x + part_t).
    hh = h_sc[...] + pt_ref[0, 0]              # (C, L) + (C, 1)

    # ---- shifted copies for the dilated k=3 conv (zero padded) -------------
    j = n % dilation_cycle                     # dilation = 2**j  (static set)

    def shifts_for(d):
        def build(h):
            if d >= L:                         # outer taps land fully in padding
                z = jnp.zeros_like(h)
                return z, z
            zpad = jnp.zeros((C, d), h.dtype)
            h_m = jnp.concatenate([zpad, h[:, :L - d]], axis=1)   # h[l - d]
            h_p = jnp.concatenate([h[:, d:], zpad], axis=1)       # h[l + d]
            return h_m, h_p
        return build

    branches = [shifts_for(2 ** i) for i in range(dilation_cycle)]

    def pick(i, h):
        if i == len(branches) - 1:
            return branches[i](h)
        return jax.lax.cond(j == i, branches[i],
                            lambda hv: pick(i + 1, hv), h)

    h_m, h_p = pick(0, hh)

    # ---- fused dilated conv: one (2C, 3C) x (3C, L) matmul ------------------
    hstk = jnp.concatenate([h_m, hh, h_p], axis=0)                  # (3C, L)
    conv = jnp.dot(wc_ref[0], hstk,
                   preferred_element_type=jnp.float32) + bc_ref[0]  # (2C, L)
    out = jnp.tanh(conv[:C]) * jax.nn.sigmoid(conv[C:])             # (C, L)

    # ---- fused res + skip 1x1 convs: one (C+S, C) x (C, L) matmul -----------
    rs = jnp.dot(wrs_ref[0], out,
                 preferred_element_type=jnp.float32) + brs_ref[0]   # (C+S, L)

    h_sc[...] = (hh + rs[:C]) * jnp.float32(math.sqrt(0.5))
    skip_ref[0] = skip_ref[0] + rs[C:]

    @pl.when(n == num_blocks - 1)
    def _finalize():
        skip_ref[...] = skip_ref[...] * jnp.float32(math.sqrt(1.0 / num_blocks))


# ---------------------------------------------------------------------------
# Residual_group forward (wrapper: tiny MLP + weight stacking in plain JAX).
# ---------------------------------------------------------------------------
def residual_group_forward(x, diffusion_steps, params):
    hp = jax.lax.Precision.HIGHEST
    swish = lambda v: v * jax.nn.sigmoid(v)

    # Diffusion-step embedding MLP.  (The reference code has a typo
    # `fc_t1(diffusion_step_embed)`; the only well-defined semantics are
    # fc_t1(diffusion_steps), implemented here.)
    emb = swish(jnp.dot(diffusion_steps, params["fc_t1_w"], precision=hp)
                + params["fc_t1_b"][0])
    emb = swish(jnp.dot(emb, params["fc_t2_w"], precision=hp)
                + params["fc_t2_b"][0])                               # (B, E)

    blocks = params["blocks"]
    N = len(blocks)
    B, C, L = x.shape
    S = blocks[0]["ws"].shape[0]
    cycle = params["dilation_cycle"]

    # ---- stack per-block weights along a leading block axis -----------------
    wt = jnp.stack([b["wt"] for b in blocks])                 # (N, C, E)
    bt = jnp.stack([b["bt"] for b in blocks])                 # (N, C, 1)
    # fc_t(emb) for ALL blocks at once -> (N, B, C, 1)
    pt = (jnp.einsum("nce,be->nbc", wt, emb, precision=hp)
          + bt[:, None, :, 0])[..., None]

    wc = jnp.stack([b["wc"] for b in blocks])                 # (N, 3, 2C, C)
    wc2d = jnp.transpose(wc, (0, 2, 1, 3)).reshape(N, 2 * C, 3 * C)   # taps on K
    bc = jnp.stack([b["bc"] for b in blocks])                 # (N, 2C, 1)
    wrs = jnp.concatenate([jnp.stack([b["wr"] for b in blocks]),
                           jnp.stack([b["ws"] for b in blocks])], axis=1)  # (N, C+S, C)
    brs = jnp.concatenate([jnp.stack([b["br"] for b in blocks]),
                           jnp.stack([b["bs"] for b in blocks])], axis=1)  # (N, C+S, 1)

    kernel = functools.partial(_residual_group_kernel,
                               num_blocks=N, dilation_cycle=cycle)

    skip = pl.pallas_call(
        kernel,
        grid=(B, N),
        out_shape=jax.ShapeDtypeStruct((B, S, L), jnp.float32),
        in_specs=[
            pl.BlockSpec((1, C, L), lambda b, n: (b, 0, 0)),            # x (read once/b)
            pl.BlockSpec((1, 1, C, 1), lambda b, n: (n, b, 0, 0)),      # part_t
            pl.BlockSpec((1, 2 * C, 3 * C), lambda b, n: (n, 0, 0)),    # conv weight
            pl.BlockSpec((1, 2 * C, 1), lambda b, n: (n, 0, 0)),        # conv bias
            pl.BlockSpec((1, C + S, C), lambda b, n: (n, 0, 0)),        # res|skip weight
            pl.BlockSpec((1, C + S, 1), lambda b, n: (n, 0, 0)),        # res|skip bias
        ],
        out_specs=pl.BlockSpec((1, S, L), lambda b, n: (b, 0, 0)),      # resident skip acc
        scratch_shapes=[pltpu.VMEM((C, L), jnp.float32)],               # carried h
        compiler_params=pltpu.CompilerParams(
            dimension_semantics=("parallel", "arbitrary")),
    )(x, pt, wc2d, bc, wrs, brs)
    return skip


# ---------------------------------------------------------------------------
# Deterministic parameter init (weight_norm at init == plain weight; we just
# draw kaiming-scaled normals).
# ---------------------------------------------------------------------------
def init_params(key, *, res_channels, skip_channels, num_res_layers,
                dilation_cycle, d_in, d_mid, d_out):
    def nrm(k, shape, fan_in):
        return jax.random.normal(k, shape, jnp.float32) * jnp.sqrt(2.0 / fan_in)

    keys = jax.random.split(key, 4 + 8 * num_res_layers)
    p = {
        "dilation_cycle": dilation_cycle,
        "fc_t1_w": nrm(keys[0], (d_in, d_mid), d_in),
        "fc_t1_b": nrm(keys[1], (1, d_mid), d_mid),
        "fc_t2_w": nrm(keys[2], (d_mid, d_out), d_mid),
        "fc_t2_b": nrm(keys[3], (1, d_out), d_out),
        "blocks": [],
    }
    kidx = 4
    C, S = res_channels, skip_channels
    for n in range(num_res_layers):
        ks = keys[kidx:kidx + 8]
        kidx += 8
        p["blocks"].append({
            "dilation": 2 ** (n % dilation_cycle),
            "wt": nrm(ks[0], (C, d_out), d_out),       # fc_t: (C, E_out)
            "bt": nrm(ks[1], (C, 1), d_out),
            "wc": nrm(ks[2], (3, 2 * C, C), 3 * C),    # dilated conv, taps-major
            "bc": nrm(ks[3], (2 * C, 1), 3 * C),
            "wr": nrm(ks[4], (C, C), C),               # res 1x1 conv
            "br": nrm(ks[5], (C, 1), C),
            "ws": nrm(ks[6], (S, C), C),               # skip 1x1 conv
            "bs": nrm(ks[7], (S, 1), C),
        })
    return p


# ---------------------------------------------------------------------------
# Pure-JAX reference (same math, XLA ops) for a sanity check.
# ---------------------------------------------------------------------------
def _reference_forward(x, t, params):
    hp = jax.lax.Precision.HIGHEST
    swish = lambda v: v * jax.nn.sigmoid(v)
    emb = swish(jnp.dot(t, params["fc_t1_w"], precision=hp) + params["fc_t1_b"][0])
    emb = swish(jnp.dot(emb, params["fc_t2_w"], precision=hp) + params["fc_t2_b"][0])
    h = x
    skip = 0.0
    for blk in params["blocks"]:
        C = blk["wr"].shape[0]
        d = blk["dilation"]
        B, _, L = h.shape
        part_t = jnp.dot(emb, blk["wt"].T, precision=hp) + blk["bt"][:, 0]   # (B, C)
        hh = h + part_t[:, :, None]
        pad = jnp.pad(hh, ((0, 0), (0, 0), (d, d)))
        conv = (jnp.einsum("oc,bcl->bol", blk["wc"][0], pad[:, :, 0:L], precision=hp)
                + jnp.einsum("oc,bcl->bol", blk["wc"][1], pad[:, :, d:d + L], precision=hp)
                + jnp.einsum("oc,bcl->bol", blk["wc"][2], pad[:, :, 2 * d:2 * d + L], precision=hp)
                + blk["bc"][None])
        out = jnp.tanh(conv[:, :C]) * jax.nn.sigmoid(conv[:, C:])
        res = jnp.einsum("oc,bcl->bol", blk["wr"], out, precision=hp) + blk["br"][None]
        sk = jnp.einsum("oc,bcl->bol", blk["ws"], out, precision=hp) + blk["bs"][None]
        h = (hh + res) * math.sqrt(0.5)
        skip = skip + sk
    return skip * math.sqrt(1.0 / len(params["blocks"]))


if __name__ == "__main__":
    # small shapes consistent with the module's forward
    B, C, S, L = 2, 8, 8, 128            # batch, res_channels, skip_channels, length
    num_layers, cycle = 4, 3
    d_in, d_mid, d_out = 32, 64, 64      # diffusion embed dims (scaled-down 128/512/512)

    key = jax.random.PRNGKey(0)
    kx, kt, kp = jax.random.split(key, 3)
    x = jax.random.normal(kx, (B, C, L), jnp.float32)
    diffusion_steps = jax.random.normal(kt, (B, d_in), jnp.float32)
    params = init_params(kp, res_channels=C, skip_channels=S,
                         num_res_layers=num_layers, dilation_cycle=cycle,
                         d_in=d_in, d_mid=d_mid, d_out=d_out)

    out = residual_group_forward(x, diffusion_steps, params)
    out = jax.block_until_ready(out)
    assert out.shape == (B, S, L)

    ref = _reference_forward(x, diffusion_steps, params)
    max_diff = float(jnp.max(jnp.abs(out - ref)))
    assert bool(jnp.allclose(out, ref, atol=1e-2, rtol=1e-2)), f"max|diff|={max_diff}"

    print("KERNEL_OK")
</pallas_src>

<mosaic_0001>
module attributes {stable_mosaic.version = 11 : i64} {
  func.func @_residual_group_kernel(%arg0: i32, %arg1: i32, %arg2: memref<1x8x128xf32, #tpu.memory_space<vmem>>, %arg3: memref<1x1x8x1xf32, #tpu.memory_space<vmem>>, %arg4: memref<1x16x24xf32, #tpu.memory_space<vmem>>, %arg5: memref<1x16x1xf32, #tpu.memory_space<vmem>>, %arg6: memref<1x16x8xf32, #tpu.memory_space<vmem>>, %arg7: memref<1x16x1xf32, #tpu.memory_space<vmem>>, %arg8: memref<1x8x128xf32, #tpu.memory_space<vmem>>, %arg9: memref<8x128xf32, #tpu.memory_space<vmem>>) attributes {dimension_semantics = [#tpu.dimension_semantics<parallel>, #tpu.dimension_semantics<arbitrary>], iteration_bounds = array<i64: 2, 4>, scalar_prefetch = 0 : i64, scratch_operands = 1 : i64, tpu.core_type = #tpu.core_type<tc>, window_params = [{transform_indices = @transform_0, window_bounds = array<i64: 1, 8, 128>}, {transform_indices = @transform_1, window_bounds = array<i64: 1, 1, 8, 1>}, {transform_indices = @transform_2, window_bounds = array<i64: 1, 16, 24>}, {transform_indices = @transform_3, window_bounds = array<i64: 1, 16, 1>}, {transform_indices = @transform_4, window_bounds = array<i64: 1, 16, 8>}, {transform_indices = @transform_5, window_bounds = array<i64: 1, 16, 1>}, {transform_indices = @transform_6, window_bounds = array<i64: 1, 8, 128>}]} {
    %c0_i32 = arith.constant 0 : i32
    %0 = arith.cmpi eq, %arg1, %c0_i32 : i32
    %1 = arith.extui %0 : i1 to i32
    %c0_i32_0 = arith.constant 0 : i32
    %2 = arith.cmpi ne, %1, %c0_i32_0 : i32
    scf.if %2 {
      %c0_37 = arith.constant 0 : index
      %c0_38 = arith.constant 0 : index
      %c0_39 = arith.constant 0 : index
      %61 = vector.load %arg2[%c0_37, %c0_38, %c0_39] : memref<1x8x128xf32, #tpu.memory_space<vmem>>, vector<1x8x128xf32>
      %62 = vector.shape_cast %61 : vector<1x8x128xf32> to vector<8x128xf32>
      %c0_40 = arith.constant 0 : index
      %c0_41 = arith.constant 0 : index
      %63 = vector.load %arg9[%c0_40, %c0_41] : memref<8x128xf32, #tpu.memory_space<vmem>>, vector<8x128xf32>
      tpu.vector_store %arg9[%c0_40, %c0_41], %62 {strides = array<i32>} : memref<8x128xf32, #tpu.memory_space<vmem>>, vector<8x128xf32>,
      %cst_42 = arith.constant 0.000000e+00 : f32
      %64 = vector.broadcast %cst_42 : f32 to vector<1x8x128xf32>
      %c0_43 = arith.constant 0 : index
      %c0_44 = arith.constant 0 : index
      %c0_45 = arith.constant 0 : index
      %65 = vector.load %arg8[%c0_43, %c0_44, %c0_45] : memref<1x8x128xf32, #tpu.memory_space<vmem>>, vector<1x8x128xf32>
      tpu.vector_store %arg8[%c0_43, %c0_44, %c0_45], %64 {strides = array<i32>} : memref<1x8x128xf32, #tpu.memory_space<vmem>>, vector<1x8x128xf32>,
    } else {
    }
    %c0 = arith.constant 0 : index
    %c0_1 = arith.constant 0 : index
    %3 = vector.load %arg9[%c0, %c0_1] : memref<8x128xf32, #tpu.memory_space<vmem>>, vector<8x128xf32>
    %c0_2 = arith.constant 0 : index
    %c0_3 = arith.constant 0 : index
    %c0_4 = arith.constant 0 : index
    %c0_5 = arith.constant 0 : index
    %4 = vector.load %arg3[%c0_2, %c0_3, %c0_4, %c0_5] : memref<1x1x8x1xf32, #tpu.memory_space<vmem>>, vector<1x1x8x1xf32>
    %5 = vector.shape_cast %4 : vector<1x1x8x1xf32> to vector<8x1xf32>
    %6 = vector.broadcast %5 : vector<8x1xf32> to vector<8x128xf32>
    %7 = arith.addf %3, %6 : vector<8x128xf32>
    %c3_i32 = arith.constant 3 : i32
    %c0_i32_6 = arith.constant 0 : i32
    %8 = arith.cmpi eq, %c3_i32, %c0_i32_6 : i32
    %c1_i32 = arith.constant 1 : i32
    %9 = arith.select %8, %c1_i32, %c3_i32 : i32
    %10 = arith.remsi %arg1, %9 : i32
    %c0_i32_7 = arith.constant 0 : i32
    %11 = arith.cmpi ne, %10, %c0_i32_7 : i32
    %c0_i32_8 = arith.constant 0 : i32
    %12 = arith.cmpi slt, %10, %c0_i32_8 : i32
    %c0_i32_9 = arith.constant 0 : i32
    %13 = arith.cmpi slt, %9, %c0_i32_9 : i32
    %14 = arith.xori %12, %13 : i1
    %15 = arith.andi %14, %11 : i1
    %16 = arith.addi %10, %9 : i32
    %17 = arith.select %15, %16, %10 : i32
    %c0_i32_10 = arith.constant 0 : i32
    %18 = arith.cmpi eq, %17, %c0_i32_10 : i32
    %19 = arith.extui %18 : i1 to i32
    %c0_i32_11 = arith.constant 0 : i32
    %20 = arith.cmpi ne, %19, %c0_i32_11 : i32
    %21:2 = scf.if %20 -> (vector<8x128xf32>, vector<8x128xf32>) {
      %cst_37 = arith.constant 0.000000e+00 : f32
      %61 = vector.broadcast %cst_37 : f32 to vector<8x1xf32>
      %62 = vector.extract_strided_slice %7 {offsets = [0, 0], sizes = [8, 127], strides = [1, 1]} : vector<8x128xf32> to vector<8x127xf32>
      %63 = tpu.concatenate %61, %62 in 1 : vector<8x1xf32>, vector<8x127xf32> -> vector<8x128xf32>
      %64 = vector.extract_strided_slice %7 {offsets = [0, 1], sizes = [8, 127], strides = [1, 1]} : vector<8x128xf32> to vector<8x127xf32>
      %65 = tpu.concatenate %64, %61 in 1 : vector<8x127xf32>, vector<8x1xf32> -> vector<8x128xf32>
      scf.yield %63, %65 : vector<8x128xf32>, vector<8x128xf32>
    } else {
      %c1_i32_37 = arith.constant 1 : i32
      %61 = arith.cmpi eq, %17, %c1_i32_37 : i32
      %62 = arith.extui %61 : i1 to i32
      %c0_i32_38 = arith.constant 0 : i32
      %63 = arith.cmpi ne, %62, %c0_i32_38 : i32
      %64:2 = scf.if %63 -> (vector<8x128xf32>, vector<8x128xf32>) {
        %cst_39 = arith.constant 0.000000e+00 : f32
        %65 = vector.broadcast %cst_39 : f32 to vector<8x2xf32>
        %66 = vector.extract_strided_slice %7 {offsets = [0, 0], sizes = [8, 126], strides = [1, 1]} : vector<8x128xf32> to vector<8x126xf32>
        %67 = tpu.concatenate %65, %66 in 1 : vector<8x2xf32>, vector<8x126xf32> -> vector<8x128xf32>
        %68 = vector.extract_strided_slice %7 {offsets = [0, 2], sizes = [8, 126], strides = [1, 1]} : vector<8x128xf32> to vector<8x126xf32>
        %69 = tpu.concatenate %68, %65 in 1 : vector<8x126xf32>, vector<8x2xf32> -> vector<8x128xf32>
        scf.yield %67, %69 : vector<8x128xf32>, vector<8x128xf32>
      } else {
        %cst_39 = arith.constant 0.000000e+00 : f32
        %65 = vector.broadcast %cst_39 : f32 to vector<8x4xf32>
        %66 = vector.extract_strided_slice %7 {offsets = [0, 0], sizes = [8, 124], strides = [1, 1]} : vector<8x128xf32> to vector<8x124xf32>
        %67 = tpu.concatenate %65, %66 in 1 : vector<8x4xf32>, vector<8x124xf32> -> vector<8x128xf32>
        %68 = vector.extract_strided_slice %7 {offsets = [0, 4], sizes = [8, 124], strides = [1, 1]} : vector<8x128xf32> to vector<8x124xf32>
        %69 = tpu.concatenate %68, %65 in 1 : vector<8x124xf32>, vector<8x4xf32> -> vector<8x128xf32>
        scf.yield %67, %69 : vector<8x128xf32>, vector<8x128xf32>
      }
      scf.yield %64#0, %64#1 : vector<8x128xf32>, vector<8x128xf32>
    }
    %22 = tpu.concatenate %21#0, %7, %21#1 in 0 : vector<8x128xf32>, vector<8x128xf32>, vector<8x128xf32> -> vector<24x128xf32>
    %c0_12 = arith.constant 0 : index
    %c0_13 = arith.constant 0 : index
    %c0_14 = arith.constant 0 : index
    %23 = vector.load %arg4[%c0_12, %c0_13, %c0_14] : memref<1x16x24xf32, #tpu.memory_space<vmem>>, vector<1x16x24xf32>
    %24 = vector.shape_cast %23 : vector<1x16x24xf32> to vector<16x24xf32>
    %cst = arith.constant dense<0.000000e+00> : vector<16x128xf32>
    %25 = tpu.matmul %24, %22, %cst {dimension_numbers = #tpu.dot_dimension_numbers<[1], [0], [0], [1], [0, 0, 1, 1], [], []>} : vector<16x24xf32>, vector<24x128xf32>, vector<16x128xf32> -> vector<16x128xf32>
    %c0_15 = arith.constant 0 : index
    %c0_16 = arith.constant 0 : index
    %c0_17 = arith.constant 0 : index
    %26 = vector.load %arg5[%c0_15, %c0_16, %c0_17] : memref<1x16x1xf32, #tpu.memory_space<vmem>>, vector<1x16x1xf32>
    %27 = vector.shape_cast %26 : vector<1x16x1xf32> to vector<16x1xf32>
    %28 = vector.broadcast %27 : vector<16x1xf32> to vector<16x128xf32>
    %29 = arith.addf %25, %28 : vector<16x128xf32>
    %30 = vector.extract_strided_slice %29 {offsets = [0, 0], sizes = [8, 128], strides = [1, 1]} : vector<16x128xf32> to vector<8x128xf32>
    %31 = math.tanh %30 : vector<8x128xf32>
    %32 = vector.extract_strided_slice %29 {offsets = [8, 0], sizes = [8, 128], strides = [1, 1]} : vector<16x128xf32> to vector<8x128xf32>
    %33 = arith.negf %32 : vector<8x128xf32>
    %34 = math.exp %33 : vector<8x128xf32>
    %cst_18 = arith.constant 1.000000e+00 : f32
    %35 = vector.broadcast %cst_18 : f32 to vector<8x128xf32>
    %36 = arith.addf %35, %34 : vector<8x128xf32>
    %37 = arith.divf %35, %36 : vector<8x128xf32>
    %38 = arith.mulf %31, %37 : vector<8x128xf32>
    %c0_19 = arith.constant 0 : index
    %c0_20 = arith.constant 0 : index
    %c0_21 = arith.constant 0 : index
    %39 = vector.load %arg6[%c0_19, %c0_20, %c0_21] : memref<1x16x8xf32, #tpu.memory_space<vmem>>, vector<1x16x8xf32>
    %40 = vector.shape_cast %39 : vector<1x16x8xf32> to vector<16x8xf32>
    %cst_22 = arith.constant dense<0.000000e+00> : vector<16x128xf32>
    %41 = tpu.matmul %40, %38, %cst_22 {dimension_numbers = #tpu.dot_dimension_numbers<[1], [0], [0], [1], [0, 0, 1, 1], [], []>} : vector<16x8xf32>, vector<8x128xf32>, vector<16x128xf32> -> vector<16x128xf32>
    %c0_23 = arith.constant 0 : index
    %c0_24 = arith.constant 0 : index
    %c0_25 = arith.constant 0 : index
    %42 = vector.load %arg7[%c0_23, %c0_24, %c0_25] : memref<1x16x1xf32, #tpu.memory_space<vmem>>, vector<1x16x1xf32>
    %43 = vector.shape_cast %42 : vector<1x16x1xf32> to vector<16x1xf32>
    %44 = vector.broadcast %43 : vector<16x1xf32> to vector<16x128xf32>
    %45 = arith.addf %41, %44 : vector<16x128xf32>
    %46 = vector.extract_strided_slice %45 {offsets = [0, 0], sizes = [8, 128], strides = [1, 1]} : vector<16x128xf32> to vector<8x128xf32>
    %47 = arith.addf %7, %46 : vector<8x128xf32>
    %cst_26 = arith.constant 0.707106769 : f32
    %48 = vector.broadcast %cst_26 : f32 to vector<8x128xf32>
    %49 = arith.mulf %47, %48 : vector<8x128xf32>
    %c0_27 = arith.constant 0 : index
    %c0_28 = arith.constant 0 : index
    %50 = vector.load %arg9[%c0_27, %c0_28] : memref<8x128xf32, #tpu.memory_space<vmem>>, vector<8x128xf32>
    tpu.vector_store %arg9[%c0_27, %c0_28], %49 {strides = array<i32>} : memref<8x128xf32, #tpu.memory_space<vmem>>, vector<8x128xf32>,
    %c0_29 = arith.constant 0 : index
    %c0_30 = arith.constant 0 : index
    %c0_31 = arith.constant 0 : index
    %51 = vector.load %arg8[%c0_29, %c0_30, %c0_31] : memref<1x8x128xf32, #tpu.memory_space<vmem>>, vector<1x8x128xf32>
    %52 = vector.shape_cast %51 : vector<1x8x128xf32> to vector<8x128xf32>
    %53 = vector.extract_strided_slice %45 {offsets = [8, 0], sizes = [8, 128], strides = [1, 1]} : vector<16x128xf32> to vector<8x128xf32>
    %54 = arith.addf %52, %53 : vector<8x128xf32>
    %c0_32 = arith.constant 0 : index
    %c0_33 = arith.constant 0 : index
    %c0_34 = arith.constant 0 : index
    %55 = vector.load %arg8[%c0_32, %c0_33, %c0_34] : memref<1x8x128xf32, #tpu.memory_space<vmem>>, vector<1x8x128xf32>
    %56 = vector.shape_cast %55 : vector<1x8x128xf32> to vector<8x128xf32>
    %57 = vector.shape_cast %54 : vector<8x128xf32> to vector<1x8x128xf32>
    tpu.vector_store %arg8[%c0_32, %c0_33, %c0_34], %57 {strides = array<i32>} : memref<1x8x128xf32, #tpu.memory_space<vmem>>, vector<1x8x128xf32>,
    %c3_i32_35 = arith.constant 3 : i32
    %58 = arith.cmpi eq, %arg1, %c3_i32_35 : i32
    %59 = arith.extui %58 : i1 to i32
    %c0_i32_36 = arith.constant 0 : i32
    %60 = arith.cmpi ne, %59, %c0_i32_36 : i32
    scf.if %60 {
      %c0_37 = arith.constant 0 : index
      %c0_38 = arith.constant 0 : index
      %c0_39 = arith.constant 0 : index
      %61 = vector.load %arg8[%c0_37, %c0_38, %c0_39] : memref<1x8x128xf32, #tpu.memory_space<vmem>>, vector<1x8x128xf32>
      %cst_40 = arith.constant 5.000000e-01 : f32
      %62 = vector.broadcast %cst_40 : f32 to vector<1x8x128xf32>
      %63 = arith.mulf %61, %62 : vector<1x8x128xf32>
      %c0_41 = arith.constant 0 : index
      %c0_42 = arith.constant 0 : index
      %c0_43 = arith.constant 0 : index
      %64 = vector.load %arg8[%c0_41, %c0_42, %c0_43] : memref<1x8x128xf32, #tpu.memory_space<vmem>>, vector<1x8x128xf32>
      tpu.vector_store %arg8[%c0_41, %c0_42, %c0_43], %63 {strides = array<i32>} : memref<1x8x128xf32, #tpu.memory_space<vmem>>, vector<1x8x128xf32>,
    } else {
    }
    return
  }
  func.func @transform_0(%arg0: i32, %arg1: i32) -> (i32, i32, i32) {
    %c0_i32 = arith.constant 0 : i32
    %c0_i32_0 = arith.constant 0 : i32
    %c0_i32_1 = arith.constant 0 : i32
    return %arg0, %c0_i32, %c0_i32_0 : i32, i32, i32
  }
  func.func @transform_1(%arg0: i32, %arg1: i32) -> (i32, i32, i32, i32) {
    %c0_i32 = arith.constant 0 : i32
    %c0_i32_0 = arith.constant 0 : i32
    %c0_i32_1 = arith.constant 0 : i32
    return %arg1, %arg0, %c0_i32, %c0_i32_0 : i32, i32, i32, i32
  }
  func.func @transform_2(%arg0: i32, %arg1: i32) -> (i32, i32, i32) {
    %c0_i32 = arith.constant 0 : i32
    %c0_i32_0 = arith.constant 0 : i32
    %c0_i32_1 = arith.constant 0 : i32
    return %arg1, %c0_i32, %c0_i32_0 : i32, i32, i32
  }
  func.func @transform_3(%arg0: i32, %arg1: i32) -> (i32, i32, i32) {
    %c0_i32 = arith.constant 0 : i32
    %c0_i32_0 = arith.constant 0 : i32
    %c0_i32_1 = arith.constant 0 : i32
    return %arg1, %c0_i32, %c0_i32_0 : i32, i32, i32
  }
  func.func @transform_4(%arg0: i32, %arg1: i32) -> (i32, i32, i32) {
    %c0_i32 = arith.constant 0 : i32
    %c0_i32_0 = arith.constant 0 : i32
    %c0_i32_1 = arith.constant 0 : i32
    return %arg1, %c0_i32, %c0_i32_0 : i32, i32, i32
  }
  func.func @transform_5(%arg0: i32, %arg1: i32) -> (i32, i32, i32) {
    %c0_i32 = arith.constant 0 : i32
    %c0_i32_0 = arith.constant 0 : i32
    %c0_i32_1 = arith.constant 0 : i32
    return %arg1, %c0_i32, %c0_i32_0 : i32, i32, i32
  }
  func.func @transform_6(%arg0: i32, %arg1: i32) -> (i32, i32, i32) {
    %c0_i32 = arith.constant 0 : i32
    %c0_i32_0 = arith.constant 0 : i32
    %c0_i32_1 = arith.constant 0 : i32
    return %arg0, %c0_i32, %c0_i32_0 : i32, i32, i32
  }
}

</mosaic_0001>

<llo_original>
// kernel: tpu_custom_call.1
$region0: #{tpu_custom_call.1}
  #allocation0 [shape = 'u32[]', space=smem, size = 0x4, offset = 0x4, fixed_abs, tag = 'smem constant byte address 0x4 - core index']
  #allocation1 [shape = 'u32[72,128]{1,0:T(1,128)}', space=vmem, size = 0x9000, scoped, tag = 'internal scratch']
  #allocation2 [shape = 'f32[8,128]{1,0:T(8,128)}', space=vmem, size = 0x1000, scoped, tag = 'scratch operand']
  %s0 = inlined_call_operand.vmem [shape: f32[2,8,128], index: 0, kind: input, shape index: {}]
  %s1 = inlined_call_operand.vmem [shape: f32[4,2,8,1], index: 1, kind: input, shape index: {}]
  %s2 = inlined_call_operand.vmem [shape: f32[4,16,24], index: 2, kind: input, shape index: {}]
  %s3 = inlined_call_operand.vmem [shape: f32[4,16,1], index: 3, kind: input, shape index: {}]
  %s4 = inlined_call_operand.vmem [shape: f32[4,16,8], index: 4, kind: input, shape index: {}]
  %s5 = inlined_call_operand.vmem [shape: f32[4,16,1], index: 5, kind: input, shape index: {}]
  %s6 = inlined_call_operand.hbm [shape: f32[2,8,128], index: 6, kind: output, shape index: {}]
  %s7 = sld [smem:[#allocation0]]
  $region81: #{tpu_custom_call.1} parent=0
    _
  %s9 = ssub.s32 1, %s7
  %s10 = scalar_select 0, %s9, %s7
  $region1: #{tpu_custom_call.1} parent=0
    #allocation3 [shape = 'u8[8192]{0}', space=vmem, size = 0x2000, scoped, tag = 'output window, operand 0']
    #allocation4 [shape = 's32[2]{0}', space=sflag, size = 0x8, scoped, tag = 'scoped memory for tpu_custom_call.1']
    %11 = vsyncpa [#allocation4], 0
    %s12 = scalar_lea.sflag [#allocation4], 1
    %13 = vsyncpa %s12, 0
    loop: start=0, step=1, limit=10
    $region2: #{tpu_custom_call.1} parent=1 // loop_pre_header
      _
    $region3: #{tpu_custom_call.1} parent=1 // loop_header
      %s15 = sphi 0, %s19
      %p16 = scmp.ge.s32.totalorder %s15, 10
      %s22 = sphi 0, %s34
      %s23 = sphi 0, %s30
      %s24 = sphi 0, %s22
      %s25 = sphi 0, %s23
      %s26 = sphi 0, %s24
      %s27 = sphi 0, %s25
      %s37 = sphi 0, %s39
      %s40 = sphi 0, %s37
      %s41 = sphi 0, %s40
      %s57 = sphi 0, %s41
      %s65 = sphi 0, %s67
      %s68 = sphi 0, %s65
      %s69 = sphi 0, %s68
      %s85 = sphi 0, %s69
      %s91 = sphi 0, %s93
      %s94 = sphi 0, %s91
      %s95 = sphi 0, %s94
      %s111 = sphi 0, %s95
      %s117 = sphi 0, %s119
      %s120 = sphi 0, %s117
      %s121 = sphi 0, %s120
      %s137 = sphi 0, %s121
      %s143 = sphi 0, %s145
      %s146 = sphi 0, %s143
      %s147 = sphi 0, %s146
      %s163 = sphi 0, %s147
      %s169 = sphi 0, %s171
      %s172 = sphi 0, %s169
      %s173 = sphi 0, %s172
      %s189 = sphi 0, %s173
      %s195 = sphi 0, %s197
      %s198 = sphi 0, %s195
      %s199 = sphi 0, %s198
      %s215 = sphi 0, %s199
    $region4: #{tpu_custom_call.1} parent=1 // loop_header_branch
      %18 = sbr.rel (%p16) target = $region8
    $region5: #{tpu_custom_call.1} parent=1 // loop_body
      %s20 = ssub.s32 %s15, 1
      %s21 = ssub.s32 %s15, 2
      %s28 = sadd.s32 1, %s23
      %p29 = scmp.ge.s32.totalorder %s28, 4
      %s30 = scalar_select %p29, 0, %s28
      %s31 = sadd.s32 1, %s22
      %s32 = scalar_select %p29, %s31, %s22
      %p33 = scmp.ge.s32.totalorder %s32, 2
      %s34 = scalar_select %p33, 0, %s32
      %s35 = ssub.s32 %s22, %s34
      %p36 = scmp.eq.s32.totalorder %s35, 0
      %s38 = sadd.s32 %s37, 1
      %s39 = scalar_select %p36, %s37, %s38
      %p42 = pneg %p36
      %p43 = scmp.eq.s32.totalorder %s15, 7
      %p44 = por %p42, %p43
      %p45 = scmp.ne.s32.totalorder %s37, %s40
      %p46 = scmp.eq.s32.totalorder %s15, 0
      %p47 = por %p45, %p46
      %p48 = scmp.ne.s32.totalorder %s37, %s40
      %p49 = scmp.eq.s32.totalorder %s20, 7
      %p50 = por %p48, %p49
      %p51 = scmp.ne.s32.totalorder %s40, %s41
      %p52 = scmp.eq.s32.totalorder %s20, 0
      %p53 = por %p51, %p52
      %p54 = scmp.ne.s32.totalorder %s40, %s41
      %p55 = scmp.eq.s32.totalorder %s21, 7
      %p56 = por %p54, %p55
      %p58 = scmp.ne.s32.totalorder %s41, %s57
      %p59 = scmp.eq.s32.totalorder %s21, 0
      %p60 = por %p58, %p59
      %s61 = ssub.s32 %s23, %s30
      %s62 = ssub.s32 %s22, %s34
      %s63 = sor.u32 %s61, %s62
      %p64 = scmp.eq.s32.totalorder %s63, 0
      %s66 = sadd.s32 %s65, 1
      %s67 = scalar_select %p64, %s65, %s66
      %p70 = pneg %p64
      %p71 = scmp.eq.s32.totalorder %s15, 7
      %p72 = por %p70, %p71
      %p73 = scmp.ne.s32.totalorder %s65, %s68
      %p74 = scmp.eq.s32.totalorder %s15, 0
      %p75 = por %p73, %p74
      %p76 = scmp.ne.s32.totalorder %s65, %s68
      %p77 = scmp.eq.s32.totalorder %s20, 7
      %p78 = por %p76, %p77
      %p79 = scmp.ne.s32.totalorder %s68, %s69
      %p80 = scmp.eq.s32.totalorder %s20, 0
      %p81 = por %p79, %p80
      %p82 = scmp.ne.s32.totalorder %s68, %s69
      %p83 = scmp.eq.s32.totalorder %s21, 7
      %p84 = por %p82, %p83
      %p86 = scmp.ne.s32.totalorder %s69, %s85
      %p87 = scmp.eq.s32.totalorder %s21, 0
      %p88 = por %p86, %p87
      %s89 = ssub.s32 %s23, %s30
      %p90 = scmp.eq.s32.totalorder %s89, 0
      %s92 = sadd.s32 %s91, 1
      %s93 = scalar_select %p90, %s91, %s92
      %p96 = pneg %p90
      %p97 = scmp.eq.s32.totalorder %s15, 7
      %p98 = por %p96, %p97
      %p99 = scmp.ne.s32.totalorder %s91, %s94
      %p100 = scmp.eq.s32.totalorder %s15, 0
      %p101 = por %p99, %p100
      %p102 = scmp.ne.s32.totalorder %s91, %s94
      %p103 = scmp.eq.s32.totalorder %s20, 7
      %p104 = por %p102, %p103
      %p105 = scmp.ne.s32.totalorder %s94, %s95
      %p106 = scmp.eq.s32.totalorder %s20, 0
      %p107 = por %p105, %p106
      %p108 = scmp.ne.s32.totalorder %s94, %s95
      %p109 = scmp.eq.s32.totalorder %s21, 7
      %p110 = por %p108, %p109
      %p112 = scmp.ne.s32.totalorder %s95, %s111
      %p113 = scmp.eq.s32.totalorder %s21, 0
      %p114 = por %p112, %p113
      %s115 = ssub.s32 %s23, %s30
      %p116 = scmp.eq.s32.totalorder %s115, 0
      %s118 = sadd.s32 %s117, 1
      %s119 = scalar_select %p116, %s117, %s118
      %p122 = pneg %p116
      %p123 = scmp.eq.s32.totalorder %s15, 7
      %p124 = por %p122, %p123
      %p125 = scmp.ne.s32.totalorder %s117, %s120
      %p126 = scmp.eq.s32.totalorder %s15, 0
      %p127 = por %p125, %p126
      %p128 = scmp.ne.s32.totalorder %s117, %s120
      %p129 = scmp.eq.s32.totalorder %s20, 7
      %p130 = por %p128, %p129
      %p131 = scmp.ne.s32.totalorder %s120, %s121
      %p132 = scmp.eq.s32.totalorder %s20, 0
      %p133 = por %p131, %p132
      %p134 = scmp.ne.s32.totalorder %s120, %s121
      %p135 = scmp.eq.s32.totalorder %s21, 7
      %p136 = por %p134, %p135
      %p138 = scmp.ne.s32.totalorder %s121, %s137
      %p139 = scmp.eq.s32.totalorder %s21, 0
      %p140 = por %p138, %p139
      %s141 = ssub.s32 %s23, %s30
      %p142 = scmp.eq.s32.totalorder %s141, 0
      %s144 = sadd.s32 %s143, 1
      %s145 = scalar_select %p142, %s143, %s144
      %p148 = pneg %p142
      %p149 = scmp.eq.s32.totalorder %s15, 7
      %p150 = por %p148, %p149
      %p151 = scmp.ne.s32.totalorder %s143, %s146
      %p152 = scmp.eq.s32.totalorder %s15, 0
      %p153 = por %p151, %p152
      %p154 = scmp.ne.s32.totalorder %s143, %s146
      %p155 = scmp.eq.s32.totalorder %s20, 7
      %p156 = por %p154, %p155
      %p157 = scmp.ne.s32.totalorder %s146, %s147
      %p158 = scmp.eq.s32.totalorder %s20, 0
      %p159 = por %p157, %p158
      %p160 = scmp.ne.s32.totalorder %s146, %s147
      %p161 = scmp.eq.s32.totalorder %s21, 7
      %p162 = por %p160, %p161
      %p164 = scmp.ne.s32.totalorder %s147, %s163
      %p165 = scmp.eq.s32.totalorder %s21, 0
      %p166 = por %p164, %p165
      %s167 = ssub.s32 %s23, %s30
      %p168 = scmp.eq.s32.totalorder %s167, 0
      %s170 = sadd.s32 %s169, 1
      %s171 = scalar_select %p168, %s169, %s170
      %p174 = pneg %p168
      %p175 = scmp.eq.s32.totalorder %s15, 7
      %p176 = por %p174, %p175
      %p177 = scmp.ne.s32.totalorder %s169, %s172
      %p178 = scmp.eq.s32.totalorder %s15, 0
      %p179 = por %p177, %p178
      %p180 = scmp.ne.s32.totalorder %s169, %s172
      %p181 = scmp.eq.s32.totalorder %s20, 7
      %p182 = por %p180, %p181
      %p183 = scmp.ne.s32.totalorder %s172, %s173
      %p184 = scmp.eq.s32.totalorder %s20, 0
      %p185 = por %p183, %p184
      %p186 = scmp.ne.s32.totalorder %s172, %s173
      %p187 = scmp.eq.s32.totalorder %s21, 7
      %p188 = por %p186, %p187
      %p190 = scmp.ne.s32.totalorder %s173, %s189
      %p191 = scmp.eq.s32.totalorder %s21, 0
      %p192 = por %p190, %p191
      %s193 = ssub.s32 %s22, %s34
      %p194 = scmp.eq.s32.totalorder %s193, 0
      %s196 = sadd.s32 %s195, 1
      %s197 = scalar_select %p194, %s195, %s196
      %p200 = pneg %p194
      %p201 = scmp.eq.s32.totalorder %s15, 7
      %p202 = por %p200, %p201
      %p203 = scmp.ne.s32.totalorder %s195, %s198
      %p204 = scmp.eq.s32.totalorder %s15, 0
      %p205 = por %p203, %p204
      %p206 = scmp.ne.s32.totalorder %s195, %s198
      %p207 = scmp.eq.s32.totalorder %s20, 7
      %p208 = por %p206, %p207
      %p209 = scmp.ne.s32.totalorder %s198, %s199
      %p210 = scmp.eq.s32.totalorder %s20, 0
      %p211 = por %p209, %p210
      %p212 = scmp.ne.s32.totalorder %s198, %s199
      %p213 = scmp.eq.s32.totalorder %s21, 7
      %p214 = por %p212, %p213
      %p216 = scmp.ne.s32.totalorder %s199, %s215
      %p217 = scmp.eq.s32.totalorder %s21, 0
      %p218 = por %p216, %p217
      %p219 = scmp.le.s32.totalorder 1, %s15
      %p220 = scmp.lt.s32.totalorder %s15, 9
      %p221 = pnand %p219, %p220
      %p222 = pneg %p221
      // Predicated region
      $region9: #{tpu_custom_call.1} parent=5 // pred_check
        _
      $region10: #{tpu_custom_call.1} parent=5 // pred_check_branch
        %224 = sbr.rel (%p221) target = $region12
      $region11: #{tpu_custom_call.1} parent=5 // pred_region
        %s225 = ssub.s32 %s15, 1
      $region12: #{tpu_custom_call.1} parent=5 // pred_fallthru
        _
      %p226 = scmp.lt.s32.totalorder %s15, 8
      // Predicated region
      $region13: #{tpu_custom_call.1} parent=5 // pred_check
        %p227 = pneg %p226
      $region14: #{tpu_custom_call.1} parent=5 // pred_check_branch
        %229 = sbr.rel (%p227) target = $region16
      $region15: #{tpu_custom_call.1} parent=5 // pred_region
        // Predicated region
        $region17: #{tpu_custom_call.1} parent=15 // pred_check
          %p230 = pneg %p47
        $region18: #{tpu_custom_call.1} parent=15 // pred_check_branch
          %232 = sbr.rel (%p230) target = $region20
        $region19: #{tpu_custom_call.1} parent=15 // pred_region
          %p233 = scmp.lt.s32.totalorder %s22, 1
          %s234 = scalar_select %p233, %s22, 1
          %s235 = smul.addr %s234, 8
          %s236 = scalar_lea.vmem %s0, %s235
        $region20: #{tpu_custom_call.1} parent=15 // pred_fallthru
          _
        // Predicated region
        $region21: #{tpu_custom_call.1} parent=15 // pred_check
          %p237 = pneg %p75
        $region22: #{tpu_custom_call.1} parent=15 // pred_check_branch
          %239 = sbr.rel (%p237) target = $region24
        $region23: #{tpu_custom_call.1} parent=15 // pred_region
          %p240 = scmp.lt.s32.totalorder %s23, 3
          %s241 = scalar_select %p240, %s23, 3
          %p242 = scmp.lt.s32.totalorder %s22, 1
          %s243 = scalar_select %p242, %s22, 1
          %s244 = smul.addr %s241, 2
          %s245 = sadd.s32 %s243, %s244
          %s246 = smul.addr %s245, 8
          %s247 = scalar_lea.vmem %s1, %s246
        $region24: #{tpu_custom_call.1} parent=15 // pred_fallthru
          _
        // Predicated region
        $region25: #{tpu_custom_call.1} parent=15 // pred_check
          %p248 = pneg %p101
        $region26: #{tpu_custom_call.1} parent=15 // pred_check_branch
          %250 = sbr.rel (%p248) target = $region28
        $region27: #{tpu_custom_call.1} parent=15 // pred_region
          %p251 = scmp.lt.s32.totalorder %s23, 3
          %s252 = scalar_select %p251, %s23, 3
          %s253 = smul.addr %s252, 2
          %s254 = smul.addr %s253, 8
          %s255 = scalar_lea.vmem %s2, %s254
        $region28: #{tpu_custom_call.1} parent=15 // pred_fallthru
          _
        // Predicated region
        $region29: #{tpu_custom_call.1} parent=15 // pred_check
          %p256 = pneg %p127
        $region30: #{tpu_custom_call.1} parent=15 // pred_check_branch
          %258 = sbr.rel (%p256) target = $region32
        $region31: #{tpu_custom_call.1} parent=15 // pred_region
          %p259 = scmp.lt.s32.totalorder %s23, 3
          %s260 = scalar_select %p259, %s23, 3
          %s261 = smul.addr %s260, 2
          %s262 = smul.addr %s261, 8
          %s263 = scalar_lea.vmem %s3, %s262
        $region32: #{tpu_custom_call.1} parent=15 // pred_fallthru
          _
        // Predicated region
        $region33: #{tpu_custom_call.1} parent=15 // pred_check
          %p264 = pneg %p153
        $region34: #{tpu_custom_call.1} parent=15 // pred_check_branch
          %266 = sbr.rel (%p264) target = $region36
        $region35: #{tpu_custom_call.1} parent=15 // pred_region
          %p267 = scmp.lt.s32.totalorder %s23, 3
          %s268 = scalar_select %p267, %s23, 3
          %s269 = smul.addr %s268, 2
          %s270 = smul.addr %s269, 8
          %s271 = scalar_lea.vmem %s4, %s270
        $region36: #{tpu_custom_call.1} parent=15 // pred_fallthru
          _
        // Predicated region
        $region37: #{tpu_custom_call.1} parent=15 // pred_check
          %p272 = pneg %p179
        $region38: #{tpu_custom_call.1} parent=15 // pred_check_branch
          %274 = sbr.rel (%p272) target = $region40
        $region39: #{tpu_custom_call.1} parent=15 // pred_region
          %p275 = scmp.lt.s32.totalorder %s23, 3
          %s276 = scalar_select %p275, %s23, 3
          %s277 = smul.addr %s276, 2
          %s278 = smul.addr %s277, 8
          %s279 = scalar_lea.vmem %s5, %s278
        $region40: #{tpu_custom_call.1} parent=15 // pred_fallthru
          _
      $region16: #{tpu_custom_call.1} parent=5 // pred_fallthru
        _
      %p280 = scmp.le.s32.totalorder 1, %s15
      %p281 = scmp.lt.s32.totalorder %s15, 9
      %p282 = pnand %p280, %p281
      %p283 = pneg %p282
      // Predicated region
      $region41: #{tpu_custom_call.1} parent=5 // pred_check
        _
      $region42: #{tpu_custom_call.1} parent=5 // pred_check_branch
        %285 = sbr.rel (%p282) target = $region44
      $region43: #{tpu_custom_call.1} parent=5 // pred_region
        %s286 = ssub.s32 %s15, 1
        %p287 = scmp.lt.s32.totalorder %s24, 1
        %s288 = scalar_select %p287, %s24, 1
        %s289 = smul.addr %s288, 8
        %s290 = scalar_lea.vmem %s0, %s289
        %p291 = pneg %p53
        %p292 = pneg %p50
        %p293 = scmp.lt.s32.totalorder %s25, 3
        %s294 = scalar_select %p293, %s25, 3
        %p295 = scmp.lt.s32.totalorder %s24, 1
        %s296 = scalar_select %p295, %s24, 1
        %s297 = smul.addr %s294, 2
        %s298 = sadd.s32 %s296, %s297
        %s299 = smul.addr %s298, 8
        %s300 = scalar_lea.vmem %s1, %s299
        %p301 = pneg %p81
        %p302 = pneg %p78
        %p303 = scmp.lt.s32.totalorder %s25, 3
        %s304 = scalar_select %p303, %s25, 3
        %s305 = smul.addr %s304, 2
        %s306 = smul.addr %s305, 8
        %s307 = scalar_lea.vmem %s2, %s306
        %p308 = pneg %p107
        %p309 = pneg %p104
        %p310 = scmp.lt.s32.totalorder %s25, 3
        %s311 = scalar_select %p310, %s25, 3
        %s312 = smul.addr %s311, 2
        %s313 = smul.addr %s312, 8
        %s314 = scalar_lea.vmem %s3, %s313
        %p315 = pneg %p133
        %p316 = pneg %p130
        %p317 = scmp.lt.s32.totalorder %s25, 3
        %s318 = scalar_select %p317, %s25, 3
        %s319 = smul.addr %s318, 2
        %s320 = smul.addr %s319, 8
        %s321 = scalar_lea.vmem %s4, %s320
        %p322 = pneg %p159
        %p323 = pneg %p156
        %p324 = scmp.lt.s32.totalorder %s25, 3
        %s325 = scalar_select %p324, %s25, 3
        %s326 = smul.addr %s325, 2
        %s327 = smul.addr %s326, 8
        %s328 = scalar_lea.vmem %s5, %s327
        %p329 = pneg %p185
        %p330 = pneg %p182
        %p331 = pneg %p211
        %p332 = pneg %p208
        %s333 = sand.u32 %s198, 1
        %s334 = scalar_lea.sflag [#allocation4], %s333
        %s335 = sand.u32 %s198, 1
        %s336 = smul.addr %s335, 8
        %s337 = scalar_lea.vmem [#allocation3], %s336
        %p338 = scmp.lt.s32.totalorder %s24, 1
        %s339 = scalar_select %p338, %s24, 1
        %s340 = smul.addr %s339, 8
        %s341 = scalar_lea.vmem %s0, %s340
        %p342 = scmp.lt.s32.totalorder %s25, 3
        %s343 = scalar_select %p342, %s25, 3
        %p344 = scmp.lt.s32.totalorder %s24, 1
        %s345 = scalar_select %p344, %s24, 1
        %s346 = smul.addr %s343, 2
        %s347 = sadd.s32 %s345, %s346
        %s348 = smul.addr %s347, 8
        %s349 = scalar_lea.vmem %s1, %s348
        %p350 = scmp.lt.s32.totalorder %s25, 3
        %s351 = scalar_select %p350, %s25, 3
        %s352 = smul.addr %s351, 2
        %s353 = smul.addr %s352, 8
        %s354 = scalar_lea.vmem %s2, %s353
        %p355 = scmp.lt.s32.totalorder %s25, 3
        %s356 = scalar_select %p355, %s25, 3
        %s357 = smul.addr %s356, 2
        %s358 = smul.addr %s357, 8
        %s359 = scalar_lea.vmem %s3, %s358
        %p360 = scmp.lt.s32.totalorder %s25, 3
        %s361 = scalar_select %p360, %s25, 3
        %s362 = smul.addr %s361, 2
        %s363 = smul.addr %s362, 8
        %s364 = scalar_lea.vmem %s4, %s363
        %p365 = scmp.lt.s32.totalorder %s25, 3
        %s366 = scalar_select %p365, %s25, 3
        %s367 = smul.addr %s366, 2
        %s368 = smul.addr %s367, 8
        %s369 = scalar_lea.vmem %s5, %s368
        %p370 = scmp.eq.s32.totalorder %s25, 0
        // Predicated region
        $region45: #{tpu_custom_call.1} parent=43 // pred_check
          %p371 = pneg %p370
        $region46: #{tpu_custom_call.1} parent=43 // pred_check_branch
          %373 = sbr.rel (%p371) target = $region48
        $region47: #{tpu_custom_call.1} parent=43 // pred_region
          %v374 = vld [vmem:[%s341] sm:$0xff]
          %375 = vst [vmem:[#allocation2] sm:$0xff] %v374
          %376 = vst [vmem:[%s337] sm:$0xff] 0.0
        $region48: #{tpu_custom_call.1} parent=43 // pred_fallthru
          _
        %v377 = vld [vmem:[#allocation2] sm:$0xff]
        %v378 = vld [vmem:[%s349] sm:$0xff]
        %380 = vset.pattern.permute.xlu0 0
        %381 = vperm.xlu0 %380, %v378
        %v382 = vpop.permute.xlu0 %381
        %v384 = vadd.f32 %v377, %v382
        %p385 = scmp.lt.s32.totalorder %s25, 0
        %s386 = ssub.s32 0, %s25
        %s387 = scalar_select %p385, %s386, %s25
        %s388 = sdiv.u32.pop %s387, 3
        %s389 = srem.u32.pop %s387, 3
        %s390 = ssub.s32 0, %s389
        %s391 = scalar_select %p385, %s390, %s389
        %p392 = scmp.ne.s32.totalorder %s391, 0
        %p393 = scmp.lt.s32.totalorder %s391, 0
        %p394 = pnand %p393, %p392
        %p395 = pneg %p394
        %s396 = sadd.s32 %s391, 3
        %s397 = scalar_select %p395, %s396, %s391
        %p398 = scmp.eq.s32.totalorder %s397, 0
        // Predicated region
        $region49: #{tpu_custom_call.1} parent=43 // pred_check
          %p399 = pneg %p398
        $region50: #{tpu_custom_call.1} parent=43 // pred_check_branch
          %401 = sbr.rel (%p399) target = $region52
        $region51: #{tpu_custom_call.1} parent=43 // pred_region
          %403 = vrot.lane.b32.xlu0 %v384, 1
          %v404 = vpop.permute.xlu0 %403
          %vm406 = vcmask 7168
          %v407 = vsel %vm406, 0.0, %v404
          %408 = vrot.lane.b32.xlu0 %v384, 127
          %v409 = vpop.permute.xlu0 %408
          %vm411 = vcmask 1039360
          %v412 = vsel %vm411, %v409, 0.0
        $region52: #{tpu_custom_call.1} parent=43 // pred_fallthru
          %v413 = vphi 0, %v407
          %v414 = vphi 0, %v412
        %p415 = pneg %p398
        // Predicated region
        $region53: #{tpu_custom_call.1} parent=43 // pred_check
          _
        $region54: #{tpu_custom_call.1} parent=43 // pred_check_branch
          %417 = sbr.rel (%p398) target = $region56
        $region55: #{tpu_custom_call.1} parent=43 // pred_region
          %p418 = scmp.eq.s32.totalorder %s397, 1
          // Predicated region
          $region57: #{tpu_custom_call.1} parent=55 // pred_check
            %p419 = pneg %p418
          $region58: #{tpu_custom_call.1} parent=55 // pred_check_branch
            %421 = sbr.rel (%p419) target = $region60
          $region59: #{tpu_custom_call.1} parent=55 // pred_region
            %423 = vrot.lane.b32.xlu0 %v384, 2
            %v424 = vpop.permute.xlu0 %423
            %vm426 = vcmask 15360
            %v427 = vsel %vm426, 0.0, %v424
            %428 = vrot.lane.b32.xlu0 %v384, 126
            %v429 = vpop.permute.xlu0 %428
            %vm431 = vcmask 1031168
            %v432 = vsel %vm431, %v429, 0.0
          $region60: #{tpu_custom_call.1} parent=55 // pred_fallthru
            %v433 = vphi 0, %v427
            %v434 = vphi 0, %v432
          %p435 = pneg %p418
          // Predicated region
          $region61: #{tpu_custom_call.1} parent=55 // pred_check
            _
          $region62: #{tpu_custom_call.1} parent=55 // pred_check_branch
            %437 = sbr.rel (%p418) target = $region64
          $region63: #{tpu_custom_call.1} parent=55 // pred_region
            %439 = vrot.lane.b32.xlu0 %v384, 4
            %v440 = vpop.permute.xlu0 %439
            %vm442 = vcmask 31744
            %v443 = vsel %vm442, 0.0, %v440
            %444 = vrot.lane.b32.xlu0 %v384, 124
            %v445 = vpop.permute.xlu0 %444
            %vm447 = vcmask 1014784
            %v448 = vsel %vm447, %v445, 0.0
          $region64: #{tpu_custom_call.1} parent=55 // pred_fallthru
            %v449 = vphi %v433, %v443
            %v450 = vphi %v434, %v448
        $region56: #{tpu_custom_call.1} parent=43 // pred_fallthru
          %v451 = vphi %v413, %v449
          %v452 = vphi %v414, %v450
        %v453 = vld [vmem:[%s354] sm:$0xff]
        %v454 = vld [vmem:[%s354 + $0x8] sm:$0xff]
        %v455 = vld [vmem:[%s359] sm:$0xff]
        %v456 = vld [vmem:[%s359 + $0x8] sm:$0xff]
        %458 = vset.pattern.permute.xlu0 0
        %459 = vperm.xlu0 %458, %v455
        %v460 = vpop.permute.xlu0 %459
        %463 = vset.pattern.permute.xlu0 0
        %464 = vperm.xlu0 %463, %v456
        %v465 = vpop.permute.xlu0 %464
        %vm467 = vcmask 195584
        %v469 = vsel %vm467, %v453, 0
        %v472 = vsel %vm467, %v454, 0
        %474 = vmatpush.msra.mxu0 0.0
        %475 = vmatpush.msra.mxu0 0.0
        %476 = vmatpush.msra.mxu0 0.0
        %477 = vmatpush.msra.mxu0 0.0
        %478 = vmatpush.msra.mxu0 0.0
        %479 = vmatpush.msra.mxu0 0.0
        %480 = vmatpush.msra.mxu0 0.0
        %481 = vmatpush.msra.mxu0 0.0
        %482 = vmatpush.msra.mxu0 0.0
        %483 = vmatpush.msra.mxu0 0.0
        %484 = vmatpush.msra.mxu0 0.0
        %485 = vmatpush.msra.mxu0 0.0
        %486 = vmatpush.msra.mxu0 0.0
        %487 = vmatpush.msra.mxu0 %v452
        %488 = vmatpush.msra.mxu0 %v384
        %489 = vmatpush.msra.mxu0 %v451
        %490 = vmatmul.f32.gmra.mxu0 %v469
        %v491 = vpop.f32.mrf.mxu0
        %v492 = vadd.f32 %v460, %v491
        %493 = vmatmul.f32.gmra.mxu0 %v472
        %v494 = vpop.f32.mrf.mxu0
        %v495 = vadd.f32 %v465, %v494
        %496 = vdwg.mxu0
        %v497 = vtanh.pop %v492
        %v498 = vxor.u32 %v495, 2147483648
        %v499 = vmul.f32 %v498, 1.442695
        %v500 = vpow.pop %v499
        %v501 = vadd.f32 %v500, 1.0
        %v502 = vrcp.pop %v501
        %v503 = vmul.f32 %v501, %v502
        %v504 = vsub.f32 1.0, %v503
        %v505 = vmul.f32 %v502, %v504
        %v506 = vadd.f32 %v502, %v505
        %vm507 = vweird.f32 %v501
        %vm508 = vweird.f32 %v502
        %vm509 = vmor %vm507, %vm508
        %v510 = vsel %vm509, %v502, %v506
        %v511 = vand.u32 2147483647, %v501
        %vm512 = vcmp.eq.f32.partialorder %v511, 8.507059e+37
        %v513 = vand.u32 %v501, 2147483648
        %v514 = vor.u32 1.1754944e-38, %v513
        %v515 = vsel %vm512, %v514, %v510
        %v516 = vmul.f32 1.0, %v515
        %v517 = vmul.f32 %v497, %v516
        %v518 = vld [vmem:[%s364] sm:$0xff]
        %v519 = vld [vmem:[%s364 + $0x8] sm:$0xff]
        %v520 = vld [vmem:[%s369] sm:$0xff]
        %v521 = vld [vmem:[%s369 + $0x8] sm:$0xff]
        %523 = vset.pattern.permute.xlu0 0
        %524 = vperm.xlu0 %523, %v520
        %v525 = vpop.permute.xlu0 %524
        %528 = vset.pattern.permute.xlu0 0
        %529 = vperm.xlu0 %528, %v521
        %v530 = vpop.permute.xlu0 %529
        %vm532 = vcmask 64512
        %v534 = vsel %vm532, %v518, 0
        %v537 = vsel %vm532, %v519, 0
        %539 = vmatpush.msra.mxu0 0.0
        %540 = vmatpush.msra.mxu0 0.0
        %541 = vmatpush.msra.mxu0 0.0
        %542 = vmatpush.msra.mxu0 0.0
        %543 = vmatpush.msra.mxu0 0.0
        %544 = vmatpush.msra.mxu0 0.0
        %545 = vmatpush.msra.mxu0 0.0
        %546 = vmatpush.msra.mxu0 0.0
        %547 = vmatpush.msra.mxu0 0.0
        %548 = vmatpush.msra.mxu0 0.0
        %549 = vmatpush.msra.mxu0 0.0
        %550 = vmatpush.msra.mxu0 0.0
        %551 = vmatpush.msra.mxu0 0.0
        %552 = vmatpush.msra.mxu0 0.0
        %553 = vmatpush.msra.mxu0 0.0
        %554 = vmatpush.msra.mxu0 %v517
        %555 = vmatmul.f32.gmra.mxu0 %v534
        %v556 = vpop.f32.mrf.mxu0
        %v557 = vadd.f32 %v525, %v556
        %558 = vmatmul.f32.gmra.mxu0 %v537
        %v559 = vpop.f32.mrf.mxu0
        %v560 = vadd.f32 %v530, %v559
        %561 = vdwg.mxu0
        %v562 = vadd.f32 %v384, %v557
        %v563 = vmul.f32 %v562, 0.70710677
        %564 = vst [vmem:[#allocation2] sm:$0xff] %v563
        %v565 = vld [vmem:[%s337] sm:$0xff]
        %v566 = vadd.f32 %v565, %v560
        %567 = vst [vmem:[%s337] sm:$0xff] %v566
        %p568 = scmp.eq.s32.totalorder %s25, 3
        // Predicated region
        $region65: #{tpu_custom_call.1} parent=43 // pred_check
          %p569 = pneg %p568
        $region66: #{tpu_custom_call.1} parent=43 // pred_check_branch
          %571 = sbr.rel (%p569) target = $region68
        $region67: #{tpu_custom_call.1} parent=43 // pred_region
          %v572 = vld [vmem:[%s337] sm:$0xff]
          %v573 = vmul.f32 %v572, 0.5
          %574 = vst [vmem:[%s337] sm:$0xff] %v573
        $region68: #{tpu_custom_call.1} parent=43 // pred_fallthru
          _
        %s575 = sand.u32 %s198, 1
        %s576 = scalar_lea.sflag [#allocation4], %s575
        %s577 = sand.u32 %s198, 1
        %s578 = smul.addr %s577, 8
        %s579 = scalar_lea.vmem [#allocation3], %s578
        // Predicated region
        $region69: #{tpu_custom_call.1} parent=43 // pred_check
          %p580 = pneg %p208
        $region70: #{tpu_custom_call.1} parent=43 // pred_check_branch
          %582 = sbr.rel (%p580) target = $region72
        $region71: #{tpu_custom_call.1} parent=43 // pred_region
          %584 = vsyncadd %s576, 0
          %s585 = smul.addr %s24, 8
          %s586 = scalar_lea.hbm %s6, %s585
          %s588 = sshll.u32 %s579, 4
          %s589 = int_to_ptr.vmem [resolvable:$true] %s588
          %s590 = sshll.u32 %s586, 4
          %s591 = int_to_ptr.hbm [resolvable:$true] %s590
          %593 = dma.vmem_to_hbm [thread:$0]  %s589, 128, %s591, %s576
        $region72: #{tpu_custom_call.1} parent=43 // pred_fallthru
          _
      $region44: #{tpu_custom_call.1} parent=5 // pred_fallthru
        _
      %p594 = scmp.le.s32.totalorder 2, %s15
      // Predicated region
      $region73: #{tpu_custom_call.1} parent=5 // pred_check
        %p595 = pneg %p594
      $region74: #{tpu_custom_call.1} parent=5 // pred_check_branch
        %597 = sbr.rel (%p595) target = $region76
      $region75: #{tpu_custom_call.1} parent=5 // pred_region
        %s598 = ssub.s32 %s15, 2
        // Predicated region
        $region77: #{tpu_custom_call.1} parent=75 // pred_check
          %p599 = pneg %p214
        $region78: #{tpu_custom_call.1} parent=75 // pred_check_branch
          %601 = sbr.rel (%p599) target = $region80
        $region79: #{tpu_custom_call.1} parent=75 // pred_region
          %s602 = sand.u32 %s199, 1
          %s603 = scalar_lea.sflag [#allocation4], %s602
          %s604 = sand.u32 %s199, 1
          %s605 = smul.addr %s604, 8
          %s606 = scalar_lea.vmem [#allocation3], %s605
          %608 = dma.done %s603, 128
        $region80: #{tpu_custom_call.1} parent=75 // pred_fallthru
          _
      $region76: #{tpu_custom_call.1} parent=5 // pred_fallthru
        _
    $region6: #{tpu_custom_call.1} parent=1 // loop_footer
      %s19 = sadd.s32 1, %s15
    $region7: #{tpu_custom_call.1} parent=1 // loop_footer_branch
      %14 = sbr.rel target = $region3
    $region8: #{tpu_custom_call.1} parent=1 // loop_exit
      _
    %609 = vsyncpa [#allocation4], 1
    %s610 = scalar_lea.sflag [#allocation4], 1
    %611 = vsyncpa %s610, 1

</llo_original>
